<compile_context>
chip_gen: v7x
topology: tpu7x:2x2x1
jax: 0.10.0
libtpu: 0.0.40
codegen_flags: <defaults>
</compile_context>

<pallas_src>
import jax
import jax.numpy as jnp
from jax.experimental import pallas as pl
from jax.experimental.pallas import tpu as pltpu


def dense_layer_kernel(p_ref, x_ref, w_ref, out_ref):
    # p_ref:   (KKC+1, N*HW)   im2col patches for the whole batch; the last row is
    #                          all-ones so the bias rides the matmul.
    # x_ref:   (N, Cin, HW)    flattened input (passthrough rows of the fused concat)
    # w_ref:   (Cout, KKC+1)   flat conv weights, bias appended as the last column
    # out_ref: (N, Cin+Cout, HW)
    n_img, cin, hw = x_ref.shape
    # One MXU matmul for the whole batch, bf16 operands, f32 accumulate.
    acc = jnp.dot(w_ref[...], p_ref[...], preferred_element_type=jnp.float32)
    acc = jnp.maximum(acc, 0.0).astype(out_ref.dtype)          # bias already folded in
    # Fused channel concat: [x ; relu(conv(x))].  The per-image slices of `acc`
    # are lane-aligned (HW = 256 = 2*128), so these are cheap dense stores.
    for n in range(n_img):                                      # static, unrolled
        out_ref[n, :cin, :] = x_ref[n]
        out_ref[n, cin:, :] = acc[:, n * hw:(n + 1) * hw]


def dense_layer_forward(x_nchw, weight_oihw, bias, compute_dtype=jnp.bfloat16):
    """Equivalent of DenseLayer.forward: cat([x, relu(conv(x))], dim=1) in NCHW."""
    N, Cin, H, W = x_nchw.shape
    Cout, _, K, _ = weight_oihw.shape
    pad = K // 2
    HW = H * W
    KKC = K * K * Cin          # true contraction length (no explicit 128-pad)
    KKCb = KKC + 1             # +1 constant-1 row that folds in the bias

    # --- wrapper-side im2col (done once; keeps all relayouts out of the kernel).
    # patches[(kh*K+kw)*Cin + ci, n*HW + h*W + w] = xpad[n, ci, h+kh, w+kw]
    xpad = jnp.pad(x_nchw, ((0, 0), (0, 0), (pad, pad), (pad, pad)))
    taps = [xpad[:, :, kh:kh + H, kw:kw + W]            # each (N, Cin, H, W)
            for kh in range(K) for kw in range(K)]
    patches = jnp.stack(taps, axis=1).reshape(N, KKC, HW)
    patches = jnp.transpose(patches, (1, 0, 2)).reshape(KKC, N * HW)
    ones_row = jnp.ones((1, N * HW), patches.dtype)             # bias row
    patches = jnp.concatenate([patches, ones_row], axis=0).astype(compute_dtype)

    # Weights in the matching flat layout, bias appended as the last column.
    w2 = jnp.transpose(weight_oihw, (0, 2, 3, 1)).reshape(Cout, KKC)
    w2 = jnp.concatenate([w2, bias.reshape(Cout, 1)], axis=1).astype(compute_dtype)

    x_flat = x_nchw.reshape(N, Cin, HW)                 # passthrough channel rows

    out_flat = pl.pallas_call(
        dense_layer_kernel,
        out_shape=jax.ShapeDtypeStruct((N, Cin + Cout, HW), x_nchw.dtype),
        grid=(1,),                                      # single step: whole batch resident
        in_specs=[
            pl.BlockSpec((KKCb, N * HW), lambda i: (0, 0)),
            pl.BlockSpec((N, Cin, HW), lambda i: (0, 0, 0)),
            pl.BlockSpec((Cout, KKCb), lambda i: (0, 0)),
        ],
        out_specs=pl.BlockSpec((N, Cin + Cout, HW), lambda i: (0, 0, 0)),
        compiler_params=pltpu.CompilerParams(
            dimension_semantics=("arbitrary",)),
    )(patches, x_flat, w2)

    # Pure metadata reshape back to NCHW (no transpose / concat needed).
    return out_flat.reshape(N, Cin + Cout, H, W)


def reference_forward(x_nchw, weight_oihw, bias):
    # Pure-JAX reference (XLA conv) for correctness check.
    conv = jax.lax.conv_general_dilated(
        x_nchw, weight_oihw,
        window_strides=(1, 1),
        padding="SAME",
        dimension_numbers=("NCHW", "OIHW", "NCHW"),
    )
    conv = conv + bias.reshape(1, -1, 1, 1)
    return jnp.concatenate([x_nchw, jnp.maximum(conv, 0.0)], axis=1)


if __name__ == "__main__":
    key = jax.random.PRNGKey(0)
    k_x, k_w, k_b = jax.random.split(key, 3)

    N, Cin, H, W = 2, 4, 16, 16
    Cout, K = 8, 5

    x = jax.random.normal(k_x, (N, Cin, H, W), jnp.float32)
    # Deterministic synthetic parameters (Conv2d(in=4, out=8, k=5, bias=True)).
    weight = jax.random.normal(k_w, (Cout, Cin, K, K), jnp.float32) * 0.1
    bias = jax.random.normal(k_b, (Cout,), jnp.float32) * 0.1

    out = dense_layer_forward(x, weight, bias)
    out = jax.block_until_ready(out)

    ref = reference_forward(x, weight, bias)
    assert out.shape == (N, Cin + Cout, H, W), out.shape
    # bf16 patches/weights with f32 accumulation: ~1e-3 relative error on the conv
    # channels; the passthrough channels are bit-exact.
    assert jnp.allclose(out, ref, atol=3e-2, rtol=3e-2), "mismatch vs reference"

    print("KERNEL_OK")
</pallas_src>

<mosaic_0001>
module attributes {stable_mosaic.version = 11 : i64} {
  func.func @dense_layer_kernel(%arg0: i32, %arg1: memref<101x512xbf16, #tpu.memory_space<vmem>>, %arg2: memref<2x4x256xf32, #tpu.memory_space<vmem>>, %arg3: memref<8x101xbf16, #tpu.memory_space<vmem>>, %arg4: memref<2x12x256xf32, #tpu.memory_space<vmem>>) attributes {dimension_semantics = [#tpu.dimension_semantics<arbitrary>], iteration_bounds = array<i64: 1>, scalar_prefetch = 0 : i64, scratch_operands = 0 : i64, tpu.core_type = #tpu.core_type<tc>, window_params = [{pipeline_mode = #tpu.pipeline_mode<synchronous>, transform_indices = @transform_0, window_bounds = array<i64: 101, 512>}, {pipeline_mode = #tpu.pipeline_mode<synchronous>, transform_indices = @transform_1, window_bounds = array<i64: 2, 4, 256>}, {pipeline_mode = #tpu.pipeline_mode<synchronous>, transform_indices = @transform_2, window_bounds = array<i64: 8, 101>}, {pipeline_mode = #tpu.pipeline_mode<synchronous>, transform_indices = @transform_3, window_bounds = array<i64: 2, 12, 256>}]} {
    %c0 = arith.constant 0 : index
    %c0_0 = arith.constant 0 : index
    %0 = vector.load %arg3[%c0, %c0_0] : memref<8x101xbf16, #tpu.memory_space<vmem>>, vector<8x101xbf16>
    %c0_1 = arith.constant 0 : index
    %c0_2 = arith.constant 0 : index
    %1 = vector.load %arg1[%c0_1, %c0_2] : memref<101x512xbf16, #tpu.memory_space<vmem>>, vector<101x512xbf16>
    %cst = arith.constant dense<0.000000e+00> : vector<8x512xf32>
    %2 = tpu.matmul %0, %1, %cst {dimension_numbers = #tpu.dot_dimension_numbers<[1], [0], [0], [1], [0, 0, 1, 1], [], []>} : vector<8x101xbf16>, vector<101x512xbf16>, vector<8x512xf32> -> vector<8x512xf32>
    %cst_3 = arith.constant 0.000000e+00 : f32
    %3 = vector.broadcast %cst_3 : f32 to vector<8x512xf32>
    %4 = arith.maximumf %2, %3 : vector<8x512xf32>
    %c0_4 = arith.constant 0 : index
    %c0_5 = arith.constant 0 : index
    %c0_6 = arith.constant 0 : index
    %5 = vector.load %arg2[%c0_4, %c0_5, %c0_6] : memref<2x4x256xf32, #tpu.memory_space<vmem>>, vector<1x4x256xf32>
    %6 = vector.shape_cast %5 : vector<1x4x256xf32> to vector<4x256xf32>
    %c0_7 = arith.constant 0 : index
    %c0_8 = arith.constant 0 : index
    %c0_9 = arith.constant 0 : index
    %7 = vector.load %arg4[%c0_7, %c0_8, %c0_9] : memref<2x12x256xf32, #tpu.memory_space<vmem>>, vector<1x4x256xf32>
    %8 = vector.shape_cast %7 : vector<1x4x256xf32> to vector<4x256xf32>
    %9 = vector.shape_cast %6 : vector<4x256xf32> to vector<1x4x256xf32>
    tpu.vector_store %arg4[%c0_7, %c0_8, %c0_9], %9 {strides = array<i32>} : memref<2x12x256xf32, #tpu.memory_space<vmem>>, vector<1x4x256xf32>,
    %10 = vector.extract_strided_slice %4 {offsets = [0, 0], sizes = [8, 256], strides = [1, 1]} : vector<8x512xf32> to vector<8x256xf32>
    %c0_10 = arith.constant 0 : index
    %c4 = arith.constant 4 : index
    %c0_11 = arith.constant 0 : index
    %11 = vector.load %arg4[%c0_10, %c4, %c0_11] : memref<2x12x256xf32, #tpu.memory_space<vmem>>, vector<1x8x256xf32>
    %12 = vector.shape_cast %11 : vector<1x8x256xf32> to vector<8x256xf32>
    %13 = vector.shape_cast %10 : vector<8x256xf32> to vector<1x8x256xf32>
    tpu.vector_store %arg4[%c0_10, %c4, %c0_11], %13 {strides = array<i32>} : memref<2x12x256xf32, #tpu.memory_space<vmem>>, vector<1x8x256xf32>,
    %c1 = arith.constant 1 : index
    %c0_12 = arith.constant 0 : index
    %c0_13 = arith.constant 0 : index
    %14 = vector.load %arg2[%c1, %c0_12, %c0_13] : memref<2x4x256xf32, #tpu.memory_space<vmem>>, vector<1x4x256xf32>
    %15 = vector.shape_cast %14 : vector<1x4x256xf32> to vector<4x256xf32>
    %c1_14 = arith.constant 1 : index
    %c0_15 = arith.constant 0 : index
    %c0_16 = arith.constant 0 : index
    %16 = vector.load %arg4[%c1_14, %c0_15, %c0_16] : memref<2x12x256xf32, #tpu.memory_space<vmem>>, vector<1x4x256xf32>
    %17 = vector.shape_cast %16 : vector<1x4x256xf32> to vector<4x256xf32>
    %18 = vector.shape_cast %15 : vector<4x256xf32> to vector<1x4x256xf32>
    tpu.vector_store %arg4[%c1_14, %c0_15, %c0_16], %18 {strides = array<i32>} : memref<2x12x256xf32, #tpu.memory_space<vmem>>, vector<1x4x256xf32>,
    %19 = vector.extract_strided_slice %4 {offsets = [0, 256], sizes = [8, 256], strides = [1, 1]} : vector<8x512xf32> to vector<8x256xf32>
    %c1_17 = arith.constant 1 : index
    %c4_18 = arith.constant 4 : index
    %c0_19 = arith.constant 0 : index
    %20 = vector.load %arg4[%c1_17, %c4_18, %c0_19] : memref<2x12x256xf32, #tpu.memory_space<vmem>>, vector<1x8x256xf32>
    %21 = vector.shape_cast %20 : vector<1x8x256xf32> to vector<8x256xf32>
    %22 = vector.shape_cast %19 : vector<8x256xf32> to vector<1x8x256xf32>
    tpu.vector_store %arg4[%c1_17, %c4_18, %c0_19], %22 {strides = array<i32>} : memref<2x12x256xf32, #tpu.memory_space<vmem>>, vector<1x8x256xf32>,
    return
  }
  func.func @transform_0(%arg0: i32) -> (i32, i32) {
    %c0_i32 = arith.constant 0 : i32
    %c0_i32_0 = arith.constant 0 : i32
    %c0_i32_1 = arith.constant 0 : i32
    return %c0_i32, %c0_i32_0 : i32, i32
  }
  func.func @transform_1(%arg0: i32) -> (i32, i32, i32) {
    %c0_i32 = arith.constant 0 : i32
    %c0_i32_0 = arith.constant 0 : i32
    %c0_i32_1 = arith.constant 0 : i32
    %c0_i32_2 = arith.constant 0 : i32
    return %c0_i32, %c0_i32_0, %c0_i32_1 : i32, i32, i32
  }
  func.func @transform_2(%arg0: i32) -> (i32, i32) {
    %c0_i32 = arith.constant 0 : i32
    %c0_i32_0 = arith.constant 0 : i32
    %c0_i32_1 = arith.constant 0 : i32
    return %c0_i32, %c0_i32_0 : i32, i32
  }
  func.func @transform_3(%arg0: i32) -> (i32, i32, i32) {
    %c0_i32 = arith.constant 0 : i32
    %c0_i32_0 = arith.constant 0 : i32
    %c0_i32_1 = arith.constant 0 : i32
    %c0_i32_2 = arith.constant 0 : i32
    return %c0_i32, %c0_i32_0, %c0_i32_1 : i32, i32, i32
  }
}

</mosaic_0001>

<llo_original>
// kernel: tpu_custom_call.1
$region0: #{tpu_custom_call.1}
  #allocation0 [shape = 'u32[]', space=smem, size = 0x4, offset = 0x4, fixed_abs, tag = 'smem constant byte address 0x4 - core index']
  #allocation1 [shape = 'u32[144,128]{1,0:T(1,128)}', space=vmem, size = 0x12000, scoped, tag = 'internal scratch']
  %s0 = inlined_call_operand.hbm [shape: bf16[101,512], index: 0, kind: input, shape index: {}]
  %s1 = inlined_call_operand.hbm [shape: f32[2,4,256], index: 1, kind: input, shape index: {}]
  %s2 = inlined_call_operand.vmem [shape: bf16[8,101], index: 2, kind: input, shape index: {}]
  %s3 = inlined_call_operand.vmem [shape: f32[2,12,256], index: 3, kind: output, shape index: {}]
  %s4 = sld [smem:[#allocation0]]
  $region30: #{tpu_custom_call.1} parent=0
    _
  %s6 = ssub.s32 1, %s4
  %s7 = scalar_select 0, %s6, %s4
  $region1: #{tpu_custom_call.1} parent=0
    #allocation2 [shape = 'u8[106496]{0}', space=vmem, size = 0x1a000, scoped, tag = 'input window, operand 0, single buffered']
    #allocation3 [shape = 's32[1]{0}', space=sflag, size = 0x4, scoped, tag = 'scoped memory for tpu_custom_call.1']
    #allocation4 [shape = 'u8[8192]{0}', space=vmem, size = 0x2000, scoped, tag = 'input window, operand 1, single buffered']
    #allocation5 [shape = 's32[1]{0}', space=sflag, size = 0x4, scoped, tag = 'scoped memory for tpu_custom_call.1']
    %8 = vsyncpa [#allocation3], 0
    %9 = vsyncpa [#allocation5], 0
    // Predicated region
    $region2: #{tpu_custom_call.1} parent=1 // pred_check
      _
    $region3: #{tpu_custom_call.1} parent=1 // pred_check_branch
      %11 = sbr.rel (0) target = $region5
    $region4: #{tpu_custom_call.1} parent=1 // pred_region
      %s13 = ssub.s32 3328, 3328
      %14 = vsyncadd [#allocation3], %s13
      %s15 = sshll.u32 [#allocation2], 4
      %s16 = int_to_ptr.vmem [resolvable:$true] %s15
      %21 = dma.hbm_to_vmem [thread:$0]  %s0, 3328, %s16, [#allocation3], 256, 256, 16
    $region5: #{tpu_custom_call.1} parent=1 // pred_fallthru
      _
    // Predicated region
    $region6: #{tpu_custom_call.1} parent=1 // pred_check
      _
    $region7: #{tpu_custom_call.1} parent=1 // pred_check_branch
      %23 = sbr.rel (0) target = $region9
    $region8: #{tpu_custom_call.1} parent=1 // pred_region
      %s25 = ssub.s32 256, 256
      %26 = vsyncadd [#allocation5], %s25
      %s27 = sshll.u32 [#allocation4], 4
      %s28 = int_to_ptr.vmem [resolvable:$true] %s27
      %33 = dma.hbm_to_vmem [thread:$0]  %s1, 256, %s28, [#allocation5], 128, 128, 8
    $region9: #{tpu_custom_call.1} parent=1 // pred_fallthru
      _
    // Predicated region
    $region10: #{tpu_custom_call.1} parent=1 // pred_check
      _
    $region11: #{tpu_custom_call.1} parent=1 // pred_check_branch
      %35 = sbr.rel (0) target = $region13
    $region12: #{tpu_custom_call.1} parent=1 // pred_region
      _
    $region13: #{tpu_custom_call.1} parent=1 // pred_fallthru
      _
    // Predicated region
    $region14: #{tpu_custom_call.1} parent=1 // pred_check
      _
    $region15: #{tpu_custom_call.1} parent=1 // pred_check_branch
      %37 = sbr.rel (0) target = $region17
    $region16: #{tpu_custom_call.1} parent=1 // pred_region
      %38 = dma.done [#allocation3], 3328
    $region17: #{tpu_custom_call.1} parent=1 // pred_fallthru
      _
    // Predicated region
    $region18: #{tpu_custom_call.1} parent=1 // pred_check
      _
    $region19: #{tpu_custom_call.1} parent=1 // pred_check_branch
      %40 = sbr.rel (0) target = $region21
    $region20: #{tpu_custom_call.1} parent=1 // pred_region
      %41 = dma.done [#allocation5], 256
    $region21: #{tpu_custom_call.1} parent=1 // pred_fallthru
      _
    %v43 = vld [vmem:[%s2] sm:$0xf]
    %v44 = vld [vmem:[#allocation2] sm:$0xff]
    %v45 = vld [vmem:[#allocation2 + $0x8] sm:$0xff]
    %v46 = vld [vmem:[#allocation2 + $0x10] sm:$0xff]
    %v47 = vld [vmem:[#allocation2 + $0x18] sm:$0xff]
    %v48 = vld [vmem:[#allocation2 + $0x20] sm:$0xff]
    %v49 = vld [vmem:[#allocation2 + $0x28] sm:$0xff]
    %v50 = vld [vmem:[#allocation2 + $0x30] sm:$0xff]
    %v51 = vld [vmem:[#allocation2 + $0x38] sm:$0xff]
    %v52 = vld [vmem:[#allocation2 + $0x40] sm:$0xff]
    %v53 = vld [vmem:[#allocation2 + $0x48] sm:$0xff]
    %v54 = vld [vmem:[#allocation2 + $0x50] sm:$0xff]
    %v55 = vld [vmem:[#allocation2 + $0x58] sm:$0xff]
    %v56 = vld [vmem:[#allocation2 + $0x60] sm:$0xff]
    %v57 = vld [vmem:[#allocation2 + $0x68] sm:$0xff]
    %v58 = vld [vmem:[#allocation2 + $0x70] sm:$0xff]
    %v59 = vld [vmem:[#allocation2 + $0x78] sm:$0xff]
    %v60 = vld [vmem:[#allocation2 + $0x80] sm:$0xff]
    %v61 = vld [vmem:[#allocation2 + $0x88] sm:$0xff]
    %v62 = vld [vmem:[#allocation2 + $0x90] sm:$0xff]
    %v63 = vld [vmem:[#allocation2 + $0x98] sm:$0xff]
    %v64 = vld [vmem:[#allocation2 + $0xa0] sm:$0xff]
    %v65 = vld [vmem:[#allocation2 + $0xa8] sm:$0xff]
    %v66 = vld [vmem:[#allocation2 + $0xb0] sm:$0xff]
    %v67 = vld [vmem:[#allocation2 + $0xb8] sm:$0xff]
    %v68 = vld [vmem:[#allocation2 + $0xc0] sm:$0x77]
    %v69 = vld [vmem:[#allocation2 + $0xc8] sm:$0x77]
    %v96 = vunpack.c.l.b16 %v44
    %v97 = vunpack.c.h.b16 %v44
    %v98 = vunpack.c.l.b16 %v45
    %v99 = vunpack.c.h.b16 %v45
    %v100 = vunpack.c.l.b16 %v46
    %v101 = vunpack.c.h.b16 %v46
    %v102 = vunpack.c.l.b16 %v47
    %v103 = vunpack.c.h.b16 %v47
    %v104 = vunpack.c.l.b16 %v48
    %v105 = vunpack.c.h.b16 %v48
    %v106 = vunpack.c.l.b16 %v49
    %v107 = vunpack.c.h.b16 %v49
    %v108 = vunpack.c.l.b16 %v50
    %v109 = vunpack.c.h.b16 %v50
    %v110 = vunpack.c.l.b16 %v51
    %v111 = vunpack.c.h.b16 %v51
    %v112 = vunpack.c.l.b16 %v52
    %v113 = vunpack.c.h.b16 %v52
    %v114 = vunpack.c.l.b16 %v53
    %v115 = vunpack.c.h.b16 %v53
    %v116 = vunpack.c.l.b16 %v54
    %v117 = vunpack.c.h.b16 %v54
    %v118 = vunpack.c.l.b16 %v55
    %v119 = vunpack.c.h.b16 %v55
    %v120 = vunpack.c.l.b16 %v56
    %v121 = vunpack.c.h.b16 %v56
    %v122 = vunpack.c.l.b16 %v57
    %v123 = vunpack.c.h.b16 %v57
    %v124 = vunpack.c.l.b16 %v58
    %v125 = vunpack.c.h.b16 %v58
    %v126 = vunpack.c.l.b16 %v59
    %v127 = vunpack.c.h.b16 %v59
    %v128 = vunpack.c.l.b16 %v60
    %v129 = vunpack.c.h.b16 %v60
    %v130 = vunpack.c.l.b16 %v61
    %v131 = vunpack.c.h.b16 %v61
    %v132 = vunpack.c.l.b16 %v62
    %v133 = vunpack.c.h.b16 %v62
    %v134 = vunpack.c.l.b16 %v63
    %v135 = vunpack.c.h.b16 %v63
    %v136 = vunpack.c.l.b16 %v64
    %v137 = vunpack.c.h.b16 %v64
    %v138 = vunpack.c.l.b16 %v65
    %v139 = vunpack.c.h.b16 %v65
    %v140 = vunpack.c.l.b16 %v66
    %v141 = vunpack.c.h.b16 %v66
    %v142 = vunpack.c.l.b16 %v67
    %v143 = vunpack.c.h.b16 %v67
    %v144 = vunpack.c.l.b16 %v68
    %v145 = vunpack.c.h.b16 %v68
    %v146 = vunpack.c.l.b16 %v69
    %v147 = vunpack.c.h.b16 %v69
    %v148 = vpack.c.b16 %v100, %v96
    %v149 = vpack.c.b16 %v101, %v97
    %v150 = vpack.c.b16 %v102, %v98
    %v151 = vpack.c.b16 %v103, %v99
    %v152 = vpack.c.b16 %v108, %v104
    %v153 = vpack.c.b16 %v109, %v105
    %v154 = vpack.c.b16 %v110, %v106
    %v155 = vpack.c.b16 %v111, %v107
    %v156 = vpack.c.b16 %v116, %v112
    %v157 = vpack.c.b16 %v117, %v113
    %v158 = vpack.c.b16 %v118, %v114
    %v159 = vpack.c.b16 %v119, %v115
    %v160 = vpack.c.b16 %v124, %v120
    %v161 = vpack.c.b16 %v125, %v121
    %v162 = vpack.c.b16 %v126, %v122
    %v163 = vpack.c.b16 %v127, %v123
    %v164 = vpack.c.b16 %v132, %v128
    %v165 = vpack.c.b16 %v133, %v129
    %v166 = vpack.c.b16 %v134, %v130
    %v167 = vpack.c.b16 %v135, %v131
    %v168 = vpack.c.b16 %v140, %v136
    %v169 = vpack.c.b16 %v141, %v137
    %v170 = vpack.c.b16 %v142, %v138
    %v171 = vpack.c.b16 %v143, %v139
    %v172 = vpack.c.b16 %v144, %v144
    %v173 = vpack.c.b16 %v145, %v145
    %v174 = vpack.c.b16 %v146, %v146
    %v175 = vpack.c.b16 %v147, %v147
    %vm200 = vcmask 826368
    %v202 = vsel %vm200, %v43, 0
    %vm204 = vcmask 1041408
    %vm205 = vcmask 1042432
    %v206 = vsel %vm204, 4294967295, 65535
    %v207 = vsel %vm205, %v206, 0
    %v209 = vand.u32 %v172, %v207
    %v212 = vand.u32 %v173, %v207
    %v215 = vand.u32 %v174, %v207
    %v218 = vand.u32 %v175, %v207
    %220 = vmatprep.subr.bf16.mxu0 %v149
    %221 = vmatpush1.bf16.msra.mxu0 %v148
    %222 = vmatprep.subr.bf16.mxu0 %v153
    %223 = vmatpush1.bf16.msra.mxu0 %v152
    %224 = vmatprep.subr.bf16.mxu0 %v157
    %225 = vmatpush1.bf16.msra.mxu0 %v156
    %226 = vmatprep.subr.bf16.mxu0 %v161
    %227 = vmatpush1.bf16.msra.mxu0 %v160
    %228 = vmatprep.subr.bf16.mxu0 %v165
    %229 = vmatpush1.bf16.msra.mxu0 %v164
    %230 = vmatprep.subr.bf16.mxu0 %v169
    %231 = vmatpush1.bf16.msra.mxu0 %v168
    %232 = vmatprep.subr.bf16.mxu0 %v212
    %233 = vmatpush1.bf16.msra.mxu0 %v209
    %234 = vmatprep.subr.bf16.mxu0 0
    %235 = vmatpush1.bf16.msra.mxu0 0
    %236 = vmatprep.subr.bf16.mxu0 0
    %237 = vmatpush1.bf16.msra.mxu0 0
    %238 = vmatprep.subr.bf16.mxu0 0
    %239 = vmatpush1.bf16.msra.mxu0 0
    %240 = vmatprep.subr.bf16.mxu0 0
    %241 = vmatpush1.bf16.msra.mxu0 0
    %242 = vmatprep.subr.bf16.mxu0 0
    %243 = vmatpush1.bf16.msra.mxu0 0
    %244 = vmatprep.subr.bf16.mxu0 0
    %245 = vmatpush1.bf16.msra.mxu0 0
    %246 = vmatprep.subr.bf16.mxu0 0
    %247 = vmatpush1.bf16.msra.mxu0 0
    %248 = vmatprep.subr.bf16.mxu0 0
    %249 = vmatpush1.bf16.msra.mxu0 0
    %250 = vmatprep.subr.bf16.mxu0 0
    %251 = vmatpush1.bf16.msra.mxu0 0
    %252 = vmatprep.mubr.bf16.mxu0 0
    %253 = vmatmul.mubr.bf16.gmra.mrb[0].mxu0 %v202
    %v254 = vpop.f32.mrb[0].mxu0
    %v255 = vadd.f32 0.0, %v254
    %v256 = vpop.f32.mrb[0].mxu0
    %v257 = vadd.f32 0.0, %v256
    %v258 = vpop.f32.mrb[0].mxu0
    %v259 = vpop.f32.mrb[0].mxu0
    %260 = vdwg.mxu0
    %261 = vmatprep.subr.bf16.mxu0 %v151
    %262 = vmatpush1.bf16.msra.mxu0 %v150
    %263 = vmatprep.subr.bf16.mxu0 %v155
    %264 = vmatpush1.bf16.msra.mxu0 %v154
    %265 = vmatprep.subr.bf16.mxu0 %v159
    %266 = vmatpush1.bf16.msra.mxu0 %v158
    %267 = vmatprep.subr.bf16.mxu0 %v163
    %268 = vmatpush1.bf16.msra.mxu0 %v162
    %269 = vmatprep.subr.bf16.mxu0 %v167
    %270 = vmatpush1.bf16.msra.mxu0 %v166
    %271 = vmatprep.subr.bf16.mxu0 %v171
    %272 = vmatpush1.bf16.msra.mxu0 %v170
    %273 = vmatprep.subr.bf16.mxu0 %v218
    %274 = vmatpush1.bf16.msra.mxu0 %v215
    %275 = vmatprep.subr.bf16.mxu0 0
    %276 = vmatpush1.bf16.msra.mxu0 0
    %277 = vmatprep.subr.bf16.mxu0 0
    %278 = vmatpush1.bf16.msra.mxu0 0
    %279 = vmatprep.subr.bf16.mxu0 0
    %280 = vmatpush1.bf16.msra.mxu0 0
    %281 = vmatprep.subr.bf16.mxu0 0
    %282 = vmatpush1.bf16.msra.mxu0 0
    %283 = vmatprep.subr.bf16.mxu0 0
    %284 = vmatpush1.bf16.msra.mxu0 0
    %285 = vmatprep.subr.bf16.mxu0 0
    %286 = vmatpush1.bf16.msra.mxu0 0
    %287 = vmatprep.subr.bf16.mxu0 0
    %288 = vmatpush1.bf16.msra.mxu0 0
    %289 = vmatprep.subr.bf16.mxu0 0
    %290 = vmatpush1.bf16.msra.mxu0 0
    %291 = vmatprep.subr.bf16.mxu0 0
    %292 = vmatpush1.bf16.msra.mxu0 0
    %293 = vmatprep.mubr.bf16.mxu0 0
    %294 = vmatmul.mubr.bf16.gmra.mrb[0].mxu0 %v202
    %v295 = vpop.f32.mrb[0].mxu0
    %v296 = vadd.f32 0.0, %v295
    %v297 = vpop.f32.mrb[0].mxu0
    %v298 = vadd.f32 0.0, %v297
    %v299 = vpop.f32.mrb[0].mxu0
    %v300 = vpop.f32.mrb[0].mxu0
    %301 = vdwg.mxu0
    %v302 = vmax.f32 %v255, 0.0
    %v303 = vmax.f32 %v257, 0.0
    %v304 = vmax.f32 %v296, 0.0
    %v305 = vmax.f32 %v298, 0.0
    %v306 = vld [vmem:[#allocation4] sm:$0xff]
    %v308 = vcombine.high %v306, %v306
    %310 = vst [vmem:[%s3] sm:$0xf] %v306
    %311 = vst [vmem:[%s3 + $0x8] sm:$0xf] %v308
    %v314 = vrot.slane %v302, 4
    %v315 = vrot.slane %v303, 4
    %318 = vst [vmem:[%s3] sm:$0xf0] %v314
    %319 = vst [vmem:[%s3 + $0x8] sm:$0xf0] %v315
    %320 = vst [vmem:[%s3 + $0x10] sm:$0xf] %v314
    %321 = vst [vmem:[%s3 + $0x18] sm:$0xf] %v315
    %s322 = scalar_lea.vmem [#allocation4], 8
    %v323 = vld [vmem:[%s322] sm:$0xff]
    %v325 = vcombine.high %v323, %v323
    %s327 = scalar_lea.vmem %s3, 32
    %328 = vst [vmem:[%s327] sm:$0xf] %v323
    %329 = vst [vmem:[%s327 + $0x8] sm:$0xf] %v325
    %v332 = vrot.slane %v304, 4
    %v333 = vrot.slane %v305, 4
    %336 = vst [vmem:[%s327] sm:$0xf0] %v332
    %337 = vst [vmem:[%s327 + $0x8] sm:$0xf0] %v333
    %338 = vst [vmem:[%s327 + $0x10] sm:$0xf] %v332
    %339 = vst [vmem:[%s327 + $0x18] sm:$0xf] %v333
    // Predicated region
    $region22: #{tpu_custom_call.1} parent=1 // pred_check
      _
    $region23: #{tpu_custom_call.1} parent=1 // pred_check_branch
      %341 = sbr.rel (0) target = $region25
    $region24: #{tpu_custom_call.1} parent=1 // pred_region
      _
    $region25: #{tpu_custom_call.1} parent=1 // pred_fallthru
      _
    // Predicated region
    $region26: #{tpu_custom_call.1} parent=1 // pred_check
      _
    $region27: #{tpu_custom_call.1} parent=1 // pred_check_branch
      %343 = sbr.rel (0) target = $region29
    $region28: #{tpu_custom_call.1} parent=1 // pred_region
      _
    $region29: #{tpu_custom_call.1} parent=1 // pred_fallthru
      _
    %344 = vsyncpa [#allocation3], 1
    %345 = vsyncpa [#allocation5], 1

</llo_original>
